<compile_context>
chip_gen: v6e
topology: v6e:2x2x1
jax: 0.10.0
libtpu: 0.0.40
codegen_flags: <defaults>
</compile_context>

<pallas_src>
import jax
import jax.numpy as jnp
from jax.experimental import pallas as pl
from jax.experimental.pallas import tpu as pltpu

LANE = 256  # output lane width / MXU-N granularity target


def _round_up(a, b):
    return (a + b - 1) // b * b


def _vmem_capacity_bytes():
    try:
        return int(pltpu.get_tpu_info().vmem_capacity_bytes)
    except Exception:
        return 64 << 20  # conservative default (v7x per-TensorCore VMEM)


def _num_tensorcores():
    try:
        kind = jax.devices()[0].device_kind.lower()
        return 2 if "v7" in kind else 1  # v7x has 2 TCs/chip; v5e/v6e have 1
    except Exception:
        return 1


def site_decoder_kernel(x_ref, w1_ref, b1_ref, w2_ref, b2_ref, w3_ref, b3_ref, o_ref):
    # x arrives f32 from HBM; cast to bf16 in-register for the MXU (f32 acc).
    x = x_ref[...].astype(jnp.bfloat16)                                       # (tm, D)
    h1 = jnp.dot(x, w1_ref[...], preferred_element_type=jnp.float32)          # (tm, H)
    h1 = jnp.maximum(h1 + b1_ref[...], 0.0)                                   # bias + ReLU
    h2 = jnp.dot(h1.astype(jnp.bfloat16), w2_ref[...],
                 preferred_element_type=jnp.float32)                          # (tm, H2)
    h2 = jnp.maximum(h2 + b2_ref[...], 0.0)
    # Final Linear(H2 -> 1) as (1,H2) x (tm,H2)^T -> (1, tm): lane-dense row.
    o = jax.lax.dot_general(w3_ref[...], h2.astype(jnp.bfloat16),
                            dimension_numbers=(((1,), (1,)), ((), ())),
                            preferred_element_type=jnp.float32)               # (1, tm)
    o_ref[...] = (o + b3_ref[0]).astype(o_ref.dtype)


def _pick_tm(n, d, h, h2, vmem_cap, n_tc):
    # 1) Bandwidth target: ~2 MiB of f32 x per grid step.
    tm = max(LANE, (2 << 20) // (4 * d))
    # 2) VMEM budget: double-buffered x + double-buffered out + weights
    #    (assume 2 copies) + bf16/f32 h1/h2 intermediates materialized by
    #    Mosaic.  TODO(synk): for very large hidden (>~2048) chunk H inside
    #    the kernel instead of shrinking tm.
    per_row = 2 * 4 * d + 2 * 4 + 2 * d + 6 * h + 6 * h2
    fixed = 2 * ((d * h + h * h2 + h2) * 2 + (h + h2) * 4) + (256 << 10)
    budget = vmem_cap // 2
    tm = min(tm, max(LANE, (budget - fixed) // per_row))
    # 3) Keep >= ~4 grid steps per TensorCore for pipelining / megacore, but
    #    never shrink the x block below ~512 KiB just to add steps.
    min_tiles = 4 * n_tc
    tm_split = _round_up(pl.cdiv(n, min_tiles), LANE)
    tm_floor = _round_up(max(1, (512 << 10) // (4 * d)), LANE)
    tm = min(tm, max(tm_split, tm_floor))
    # 4) Never bigger than the (lane-rounded) problem.
    tm = min(tm, _round_up(n, LANE))
    return max(LANE, (tm // LANE) * LANE)


def site_decoder_forward(x, params, *, tm=None):
    """x: [batch, seq, input_dim] -> [batch, seq] (float32)."""
    w1, b1, w2, b2, w3, b3 = params
    batch, seq, input_dim = x.shape
    hidden = w1.shape[1]
    hidden2 = w2.shape[1]
    n = batch * seq

    vmem_cap = _vmem_capacity_bytes()
    if tm is None:
        tm = _pick_tm(n, input_dim, hidden, hidden2, vmem_cap, _num_tensorcores())
    else:
        tm = max(8, (int(tm) // 8) * 8)
    n_tiles = pl.cdiv(n, tm)
    n_pad = n_tiles * tm

    # x stays f32 in HBM (single read stream, no wrapper cast/pad).  The
    # ragged last block is handled by Pallas; its rows are row-independent
    # garbage and get sliced off below.
    x2d = x.reshape(n, input_dim)
    w1b = w1.astype(jnp.bfloat16)
    w2b = w2.astype(jnp.bfloat16)
    b1f = b1.reshape(1, hidden).astype(jnp.float32)
    b2f = b2.reshape(1, hidden2).astype(jnp.float32)
    w3row = w3.reshape(1, hidden2).astype(jnp.bfloat16)   # (1, H2) row, bf16
    b3s = b3.reshape(1).astype(jnp.float32)                # scalar -> SMEM

    flops = 2 * n_pad * (input_dim * hidden + hidden * hidden2 + hidden2)
    bytes_accessed = (n * input_dim * 4 + n_pad * 4
                      + (input_dim * hidden + hidden * hidden2 + hidden2) * 2
                      + (hidden + hidden2 + 1) * 4)

    # Estimated per-step VMEM (blocks + intermediates); weights counted x2
    # (double-buffered even though grid-invariant) to stay conservative.
    est_vmem = (2 * tm * input_dim * 4 + 2 * tm * 4
                + 2 * ((input_dim * hidden + hidden * hidden2 + hidden2) * 2
                       + (hidden + hidden2) * 4)
                + tm * (2 * input_dim + 6 * hidden + 6 * hidden2))
    vmem_limit = int(min(int(vmem_cap * 0.9),
                         max(32 << 20, int(est_vmem * 1.5))))

    out = pl.pallas_call(
        site_decoder_kernel,
        out_shape=jax.ShapeDtypeStruct((n_tiles, tm), jnp.float32),
        grid_spec=pltpu.PrefetchScalarGridSpec(
            num_scalar_prefetch=0,
            grid=(n_tiles,),
            in_specs=[
                pl.BlockSpec((tm, input_dim), lambda i: (i, 0)),        # x row tile
                pl.BlockSpec((input_dim, hidden), lambda i: (0, 0)),    # W1 (resident)
                pl.BlockSpec((1, hidden), lambda i: (0, 0)),            # b1
                pl.BlockSpec((hidden, hidden2), lambda i: (0, 0)),      # W2 (resident)
                pl.BlockSpec((1, hidden2), lambda i: (0, 0)),           # b2
                pl.BlockSpec((1, hidden2), lambda i: (0, 0)),           # W3 row
                pl.BlockSpec(memory_space=pltpu.MemorySpace.SMEM),      # b3 scalar
            ],
            out_specs=pl.BlockSpec((1, tm), lambda i: (i, 0)),          # lane-dense row
        ),
        compiler_params=pltpu.CompilerParams(
            dimension_semantics=("parallel",),
            vmem_limit_bytes=vmem_limit),
        cost_estimate=pl.CostEstimate(flops=flops, transcendentals=0,
                                      bytes_accessed=bytes_accessed),
    )(x2d, w1b, b1f, w2b, b2f, w3row, b3s)

    return out.reshape(n_pad)[:n].reshape(batch, seq)


def init_params(key, input_dim, hidden_dim):
    """Deterministic init matching the PyTorch module's parameter shapes.

    PyTorch nn.Linear stores weight as (out, in); we store the transpose
    (in, out) so the kernel computes x @ W + b directly (same math)."""
    h2 = hidden_dim // 2
    k = jax.random.split(key, 6)

    def lin(kw, kb, fan_in, fan_out):
        bound = 1.0 / jnp.sqrt(fan_in)
        w = jax.random.uniform(kw, (fan_in, fan_out), jnp.float32, -bound, bound)
        b = jax.random.uniform(kb, (1, fan_out), jnp.float32, -bound, bound)
        return w, b

    w1, b1 = lin(k[0], k[1], input_dim, hidden_dim)
    w2, b2 = lin(k[2], k[3], hidden_dim, h2)
    w3, b3 = lin(k[4], k[5], h2, 1)
    return (w1, b1, w2, b2, w3, b3)


def reference_forward(x, params):
    """Pure-JAX f32 reference of the PyTorch forward."""
    w1, b1, w2, b2, w3, b3 = params
    h1 = jnp.maximum(x @ w1 + b1[0], 0.0)
    h2 = jnp.maximum(h1 @ w2 + b2[0], 0.0)
    return (h2 @ w3 + b3[0]).squeeze(-1)


if __name__ == "__main__":
    key = jax.random.PRNGKey(0)
    k_x, k_p = jax.random.split(key)

    batch, seq, input_dim, hidden_dim = 2, 8, 32, 32
    x = jax.random.normal(k_x, (batch, seq, input_dim), jnp.float32)
    params = init_params(k_p, input_dim, hidden_dim)

    out = jax.block_until_ready(site_decoder_forward(x, params))
    ref = reference_forward(x, params)

    assert out.shape == (batch, seq), out.shape
    # bf16 MXU inputs (f32 accumulation) -> bf16-appropriate tolerance vs f32 ref.
    max_err = float(jnp.max(jnp.abs(out - ref)))
    assert jnp.allclose(out, ref, atol=2e-2, rtol=2e-2), max_err

    print("KERNEL_OK")
</pallas_src>

<mosaic_0001>
module attributes {stable_mosaic.version = 11 : i64} {
  func.func @site_decoder_kernel(%arg0: i32, %arg1: memref<256x32xf32, #tpu.memory_space<vmem>>, %arg2: memref<32x32xbf16, #tpu.memory_space<vmem>>, %arg3: memref<1x32xf32, #tpu.memory_space<vmem>>, %arg4: memref<32x16xbf16, #tpu.memory_space<vmem>>, %arg5: memref<1x16xf32, #tpu.memory_space<vmem>>, %arg6: memref<1x16xbf16, #tpu.memory_space<vmem>>, %arg7: memref<1xf32, #tpu.memory_space<smem>>, %arg8: memref<1x256xf32, #tpu.memory_space<vmem>>) attributes {dimension_semantics = [#tpu.dimension_semantics<parallel>], iteration_bounds = array<i64: 1>, scalar_prefetch = 0 : i64, scratch_operands = 0 : i64, tpu.core_type = #tpu.core_type<tc>, window_params = [{transform_indices = @transform_0, window_bounds = array<i64: 256, 32>}, {pipeline_mode = #tpu.pipeline_mode<synchronous>, transform_indices = @transform_1, window_bounds = array<i64: 32, 32>}, {pipeline_mode = #tpu.pipeline_mode<synchronous>, transform_indices = @transform_2, window_bounds = array<i64: 1, 32>}, {pipeline_mode = #tpu.pipeline_mode<synchronous>, transform_indices = @transform_3, window_bounds = array<i64: 32, 16>}, {pipeline_mode = #tpu.pipeline_mode<synchronous>, transform_indices = @transform_4, window_bounds = array<i64: 1, 16>}, {pipeline_mode = #tpu.pipeline_mode<synchronous>, transform_indices = @transform_5, window_bounds = array<i64: 1, 16>}, {transform_indices = @transform_6, window_bounds = array<i64: 1>}, {transform_indices = @transform_7, window_bounds = array<i64: 1, 256>}]} {
    %c0 = arith.constant 0 : index
    %c0_0 = arith.constant 0 : index
    %0 = vector.load %arg1[%c0, %c0_0] : memref<256x32xf32, #tpu.memory_space<vmem>>, vector<256x32xf32>
    %1 = arith.truncf %0 : vector<256x32xf32> to vector<256x32xbf16>
    %c0_1 = arith.constant 0 : index
    %c0_2 = arith.constant 0 : index
    %2 = vector.load %arg2[%c0_1, %c0_2] : memref<32x32xbf16, #tpu.memory_space<vmem>>, vector<32x32xbf16>
    %cst = arith.constant dense<0.000000e+00> : vector<256x32xf32>
    %3 = tpu.matmul %1, %2, %cst {dimension_numbers = #tpu.dot_dimension_numbers<[1], [0], [0], [1], [0, 0, 1, 1], [], []>} : vector<256x32xbf16>, vector<32x32xbf16>, vector<256x32xf32> -> vector<256x32xf32>
    %c0_3 = arith.constant 0 : index
    %c0_4 = arith.constant 0 : index
    %4 = vector.load %arg3[%c0_3, %c0_4] : memref<1x32xf32, #tpu.memory_space<vmem>>, vector<1x32xf32>
    %5 = vector.broadcast %4 : vector<1x32xf32> to vector<256x32xf32>
    %6 = arith.addf %3, %5 : vector<256x32xf32>
    %cst_5 = arith.constant 0.000000e+00 : f32
    %7 = vector.broadcast %cst_5 : f32 to vector<256x32xf32>
    %8 = arith.maximumf %6, %7 : vector<256x32xf32>
    %9 = arith.truncf %8 : vector<256x32xf32> to vector<256x32xbf16>
    %c0_6 = arith.constant 0 : index
    %c0_7 = arith.constant 0 : index
    %10 = vector.load %arg4[%c0_6, %c0_7] : memref<32x16xbf16, #tpu.memory_space<vmem>>, vector<32x16xbf16>
    %cst_8 = arith.constant dense<0.000000e+00> : vector<256x16xf32>
    %11 = tpu.matmul %9, %10, %cst_8 {dimension_numbers = #tpu.dot_dimension_numbers<[1], [0], [0], [1], [0, 0, 1, 1], [], []>} : vector<256x32xbf16>, vector<32x16xbf16>, vector<256x16xf32> -> vector<256x16xf32>
    %c0_9 = arith.constant 0 : index
    %c0_10 = arith.constant 0 : index
    %12 = vector.load %arg5[%c0_9, %c0_10] : memref<1x16xf32, #tpu.memory_space<vmem>>, vector<1x16xf32>
    %13 = vector.broadcast %12 : vector<1x16xf32> to vector<256x16xf32>
    %14 = arith.addf %11, %13 : vector<256x16xf32>
    %cst_11 = arith.constant 0.000000e+00 : f32
    %15 = vector.broadcast %cst_11 : f32 to vector<256x16xf32>
    %16 = arith.maximumf %14, %15 : vector<256x16xf32>
    %c0_12 = arith.constant 0 : index
    %c0_13 = arith.constant 0 : index
    %17 = vector.load %arg6[%c0_12, %c0_13] : memref<1x16xbf16, #tpu.memory_space<vmem>>, vector<1x16xbf16>
    %18 = arith.truncf %16 : vector<256x16xf32> to vector<256x16xbf16>
    %cst_14 = arith.constant dense<0.000000e+00> : vector<1x256xf32>
    %19 = tpu.matmul %17, %18, %cst_14 {dimension_numbers = #tpu.dot_dimension_numbers<[1], [1], [0], [0], [0, 0, 1, 0], [], []>} : vector<1x16xbf16>, vector<256x16xbf16>, vector<1x256xf32> -> vector<1x256xf32>
    %c0_15 = arith.constant 0 : index
    %20 = memref.load %arg7[%c0_15] : memref<1xf32, #tpu.memory_space<smem>>
    %21 = vector.broadcast %20 : f32 to vector<1x256xf32>
    %22 = arith.addf %19, %21 : vector<1x256xf32>
    %c0_16 = arith.constant 0 : index
    %c0_17 = arith.constant 0 : index
    %23 = vector.load %arg8[%c0_16, %c0_17] : memref<1x256xf32, #tpu.memory_space<vmem>>, vector<1x256xf32>
    tpu.vector_store %arg8[%c0_16, %c0_17], %22 {strides = array<i32>} : memref<1x256xf32, #tpu.memory_space<vmem>>, vector<1x256xf32>,
    return
  }
  func.func @transform_0(%arg0: i32) -> (i32, i32) {
    %c0_i32 = arith.constant 0 : i32
    %c0_i32_0 = arith.constant 0 : i32
    return %arg0, %c0_i32 : i32, i32
  }
  func.func @transform_1(%arg0: i32) -> (i32, i32) {
    %c0_i32 = arith.constant 0 : i32
    %c0_i32_0 = arith.constant 0 : i32
    %c0_i32_1 = arith.constant 0 : i32
    return %c0_i32, %c0_i32_0 : i32, i32
  }
  func.func @transform_2(%arg0: i32) -> (i32, i32) {
    %c0_i32 = arith.constant 0 : i32
    %c0_i32_0 = arith.constant 0 : i32
    %c0_i32_1 = arith.constant 0 : i32
    return %c0_i32, %c0_i32_0 : i32, i32
  }
  func.func @transform_3(%arg0: i32) -> (i32, i32) {
    %c0_i32 = arith.constant 0 : i32
    %c0_i32_0 = arith.constant 0 : i32
    %c0_i32_1 = arith.constant 0 : i32
    return %c0_i32, %c0_i32_0 : i32, i32
  }
  func.func @transform_4(%arg0: i32) -> (i32, i32) {
    %c0_i32 = arith.constant 0 : i32
    %c0_i32_0 = arith.constant 0 : i32
    %c0_i32_1 = arith.constant 0 : i32
    return %c0_i32, %c0_i32_0 : i32, i32
  }
  func.func @transform_5(%arg0: i32) -> (i32, i32) {
    %c0_i32 = arith.constant 0 : i32
    %c0_i32_0 = arith.constant 0 : i32
    %c0_i32_1 = arith.constant 0 : i32
    return %c0_i32, %c0_i32_0 : i32, i32
  }
  func.func @transform_6(%arg0: i32) -> i32 {
    %c0_i32 = arith.constant 0 : i32
    %c0_i32_0 = arith.constant 0 : i32
    return %c0_i32 : i32
  }
  func.func @transform_7(%arg0: i32) -> (i32, i32) {
    %c0_i32 = arith.constant 0 : i32
    %c0_i32_0 = arith.constant 0 : i32
    return %arg0, %c0_i32 : i32, i32
  }
}

</mosaic_0001>

<llo_original>
// kernel: tpu_custom_call.1
$region0: #{tpu_custom_call.1}
  #allocation0 [shape = 'u32[]', space=smem, size = 0x4, offset = 0x4, fixed_abs, tag = 'smem constant byte address 0x4 - core index']
  #allocation1 [shape = 'u32[144,128]{1,0:T(1,128)}', space=vmem, size = 0x12000, scoped, tag = 'internal scratch']
  #allocation2 [shape = 'f32[1]{0:T(128)S(6)}', space=smem, size = 0x200, scoped, tag = 'scoped memory for tpu_custom_call.1']
  %s0 = inlined_call_operand.vmem [shape: f32[16,32], index: 0, kind: input, shape index: {}]
  %s1 = inlined_call_operand.hbm [shape: bf16[32,32], index: 1, kind: input, shape index: {}]
  %s2 = inlined_call_operand.vmem [shape: f32[1,32], index: 2, kind: input, shape index: {}]
  %s3 = inlined_call_operand.vmem [shape: bf16[32,16], index: 3, kind: input, shape index: {}]
  %s4 = inlined_call_operand.vmem [shape: f32[1,16], index: 4, kind: input, shape index: {}]
  %s5 = inlined_call_operand.vmem [shape: bf16[1,16], index: 5, kind: input, shape index: {}]
  %s6 = inlined_call_operand.<no memory space> [shape: f32[1], index: 6, kind: input, shape index: {}]
  %s7 = inlined_call_operand.hbm [shape: f32[1,256], index: 7, kind: output, shape index: {}]
  %s8 = sld [smem:[#allocation0]]
  $region42: #{tpu_custom_call.1} parent=0
    _
  %s10 = ssub.s32 1, %s8
  %s11 = scalar_select 0, %s10, %s8
  %12 = sst [smem:[#allocation2]] %s6
  $region1: #{tpu_custom_call.1} parent=0
    #allocation3 [shape = 'u8[8192]{0}', space=vmem, size = 0x2000, scoped, tag = 'input window, operand 1, single buffered']
    #allocation4 [shape = 's32[1]{0}', space=sflag, size = 0x4, scoped, tag = 'scoped memory for tpu_custom_call.1']
    #allocation5 [shape = 's32[1]{0}', space=sflag, size = 0x4, scoped, tag = 'scoped memory for tpu_custom_call.1']
    #allocation6 [shape = 'u8[1024]{0}', space=vmem, size = 0x400, scoped, tag = 'output window, operand 0, single buffered']
    %13 = vsyncpa [#allocation4], 0
    %14 = vsyncpa [#allocation5], 0
    // Predicated region
    $region2: #{tpu_custom_call.1} parent=1 // pred_check
      _
    $region3: #{tpu_custom_call.1} parent=1 // pred_check_branch
      %16 = sbr.rel (0) target = $region5
    $region4: #{tpu_custom_call.1} parent=1 // pred_region
      _
    $region5: #{tpu_custom_call.1} parent=1 // pred_fallthru
      _
    // Predicated region
    $region6: #{tpu_custom_call.1} parent=1 // pred_check
      _
    $region7: #{tpu_custom_call.1} parent=1 // pred_check_branch
      %18 = sbr.rel (0) target = $region9
    $region8: #{tpu_custom_call.1} parent=1 // pred_region
      %s20 = ssub.s32 256, 256
      %21 = vsyncadd [#allocation4], %s20
      %s22 = sshll.u32 [#allocation3], 4
      %s23 = int_to_ptr.vmem [resolvable:$true] %s22
      %28 = dma.hbm_to_vmem [thread:$0]  %s1, 256, %s23, [#allocation4], 64, 64, 4
    $region9: #{tpu_custom_call.1} parent=1 // pred_fallthru
      _
    // Predicated region
    $region10: #{tpu_custom_call.1} parent=1 // pred_check
      _
    $region11: #{tpu_custom_call.1} parent=1 // pred_check_branch
      %30 = sbr.rel (0) target = $region13
    $region12: #{tpu_custom_call.1} parent=1 // pred_region
      _
    $region13: #{tpu_custom_call.1} parent=1 // pred_fallthru
      _
    // Predicated region
    $region14: #{tpu_custom_call.1} parent=1 // pred_check
      _
    $region15: #{tpu_custom_call.1} parent=1 // pred_check_branch
      %32 = sbr.rel (0) target = $region17
    $region16: #{tpu_custom_call.1} parent=1 // pred_region
      _
    $region17: #{tpu_custom_call.1} parent=1 // pred_fallthru
      _
    // Predicated region
    $region18: #{tpu_custom_call.1} parent=1 // pred_check
      _
    $region19: #{tpu_custom_call.1} parent=1 // pred_check_branch
      %34 = sbr.rel (0) target = $region21
    $region20: #{tpu_custom_call.1} parent=1 // pred_region
      _
    $region21: #{tpu_custom_call.1} parent=1 // pred_fallthru
      _
    // Predicated region
    $region22: #{tpu_custom_call.1} parent=1 // pred_check
      _
    $region23: #{tpu_custom_call.1} parent=1 // pred_check_branch
      %36 = sbr.rel (0) target = $region25
    $region24: #{tpu_custom_call.1} parent=1 // pred_region
      _
    $region25: #{tpu_custom_call.1} parent=1 // pred_fallthru
      _
    // Predicated region
    $region26: #{tpu_custom_call.1} parent=1 // pred_check
      _
    $region27: #{tpu_custom_call.1} parent=1 // pred_check_branch
      %38 = sbr.rel (0) target = $region29
    $region28: #{tpu_custom_call.1} parent=1 // pred_region
      _
    $region29: #{tpu_custom_call.1} parent=1 // pred_fallthru
      _
    // Predicated region
    $region30: #{tpu_custom_call.1} parent=1 // pred_check
      _
    $region31: #{tpu_custom_call.1} parent=1 // pred_check_branch
      %40 = sbr.rel (0) target = $region33
    $region32: #{tpu_custom_call.1} parent=1 // pred_region
      %41 = dma.done [#allocation4], 256
    $region33: #{tpu_custom_call.1} parent=1 // pred_fallthru
      _
    %v43 = vld [vmem:[%s0] sm:$0xff]
    %v44 = vld [vmem:[%s0 + $0x8] sm:$0xff]
    %v45 = vld [vmem:[%s0 + $0x10] sm:$0xff]
    %v46 = vld [vmem:[%s0 + $0x18] sm:$0xff]
    %v47 = vld [vmem:[%s0 + $0x20] sm:$0xff]
    %v48 = vld [vmem:[%s0 + $0x28] sm:$0xff]
    %v49 = vld [vmem:[%s0 + $0x30] sm:$0xff]
    %v50 = vld [vmem:[%s0 + $0x38] sm:$0xff]
    %v51 = vld [vmem:[%s0 + $0x40] sm:$0xff]
    %v52 = vld [vmem:[%s0 + $0x48] sm:$0xff]
    %v53 = vld [vmem:[%s0 + $0x50] sm:$0xff]
    %v54 = vld [vmem:[%s0 + $0x58] sm:$0xff]
    %v55 = vld [vmem:[%s0 + $0x60] sm:$0xff]
    %v56 = vld [vmem:[%s0 + $0x68] sm:$0xff]
    %v57 = vld [vmem:[%s0 + $0x70] sm:$0xff]
    %v58 = vld [vmem:[%s0 + $0x78] sm:$0xff]
    %v59 = vld [vmem:[%s0 + $0x80] sm:$0xff]
    %v60 = vld [vmem:[%s0 + $0x88] sm:$0xff]
    %v61 = vld [vmem:[%s0 + $0x90] sm:$0xff]
    %v62 = vld [vmem:[%s0 + $0x98] sm:$0xff]
    %v63 = vld [vmem:[%s0 + $0xa0] sm:$0xff]
    %v64 = vld [vmem:[%s0 + $0xa8] sm:$0xff]
    %v65 = vld [vmem:[%s0 + $0xb0] sm:$0xff]
    %v66 = vld [vmem:[%s0 + $0xb8] sm:$0xff]
    %v67 = vld [vmem:[%s0 + $0xc0] sm:$0xff]
    %v68 = vld [vmem:[%s0 + $0xc8] sm:$0xff]
    %v69 = vld [vmem:[%s0 + $0xd0] sm:$0xff]
    %v70 = vld [vmem:[%s0 + $0xd8] sm:$0xff]
    %v71 = vld [vmem:[%s0 + $0xe0] sm:$0xff]
    %v72 = vld [vmem:[%s0 + $0xe8] sm:$0xff]
    %v73 = vld [vmem:[%s0 + $0xf0] sm:$0xff]
    %v74 = vld [vmem:[%s0 + $0xf8] sm:$0xff]
    %v75 = vpack.c.bf16 %v44, %v43
    %v76 = vpack.c.bf16 %v46, %v45
    %v77 = vpack.c.bf16 %v48, %v47
    %v78 = vpack.c.bf16 %v50, %v49
    %v79 = vpack.c.bf16 %v52, %v51
    %v80 = vpack.c.bf16 %v54, %v53
    %v81 = vpack.c.bf16 %v56, %v55
    %v82 = vpack.c.bf16 %v58, %v57
    %v83 = vpack.c.bf16 %v60, %v59
    %v84 = vpack.c.bf16 %v62, %v61
    %v85 = vpack.c.bf16 %v64, %v63
    %v86 = vpack.c.bf16 %v66, %v65
    %v87 = vpack.c.bf16 %v68, %v67
    %v88 = vpack.c.bf16 %v70, %v69
    %v89 = vpack.c.bf16 %v72, %v71
    %v90 = vpack.c.bf16 %v74, %v73
    %v91 = vld [vmem:[#allocation3] sm:$0xf]
    %v92 = vld [vmem:[#allocation3 + $0x4] sm:$0xf]
    %v93 = vld [vmem:[#allocation3 + $0x8] sm:$0xf]
    %v94 = vld [vmem:[#allocation3 + $0xc] sm:$0xf]
    %v95 = vld [vmem:[%s2] sm:$0x1]
    %v97 = vlaneseq
    %v98 = vshrl.u32 %v97, 7
    %v99 = vsub.s32 0, %v98
    %v100 = vrot.slane %v95, %v99
    %v106 = vunpack.c.l.b16 %v91
    %v107 = vunpack.c.l.b16 %v92
    %v108 = vunpack.c.l.b16 %v93
    %v109 = vunpack.c.l.b16 %v94
    %v110 = vpack.c.b16 %v107, %v106
    %v111 = vpack.c.b16 %v109, %v108
    %vm114 = vcmask 261120
    %v116 = vsel %vm114, %v75, 0
    %v119 = vsel %vm114, %v76, 0
    %v122 = vsel %vm114, %v77, 0
    %v125 = vsel %vm114, %v78, 0
    %v128 = vsel %vm114, %v79, 0
    %v131 = vsel %vm114, %v80, 0
    %v134 = vsel %vm114, %v81, 0
    %v137 = vsel %vm114, %v82, 0
    %v140 = vsel %vm114, %v83, 0
    %v143 = vsel %vm114, %v84, 0
    %v146 = vsel %vm114, %v85, 0
    %v149 = vsel %vm114, %v86, 0
    %v152 = vsel %vm114, %v87, 0
    %v155 = vsel %vm114, %v88, 0
    %v158 = vsel %vm114, %v89, 0
    %v161 = vsel %vm114, %v90, 0
    %163 = vmatprep.subr.bf16.mxu0 0
    %164 = vmatpush1.bf16.msra.mxu0 0
    %165 = vmatprep.subr.bf16.mxu0 0
    %166 = vmatpush1.bf16.msra.mxu0 0
    %167 = vmatprep.subr.bf16.mxu0 0
    %168 = vmatpush1.bf16.msra.mxu0 0
    %169 = vmatprep.subr.bf16.mxu0 0
    %170 = vmatpush1.bf16.msra.mxu0 0
    %171 = vmatprep.subr.bf16.mxu0 0
    %172 = vmatpush1.bf16.msra.mxu0 0
    %173 = vmatprep.subr.bf16.mxu0 0
    %174 = vmatpush1.bf16.msra.mxu0 0
    %175 = vmatprep.subr.bf16.mxu0 0
    %176 = vmatpush1.bf16.msra.mxu0 %v111
    %177 = vmatprep.subr.bf16.mxu0 0
    %178 = vmatpush1.bf16.msra.mxu0 %v110
    %179 = vmatprep.subr.bf16.mxu0 0
    %180 = vmatpush2.bf16.msra.mxu0 0
    %181 = vmatprep.subr.bf16.mxu0 0
    %182 = vmatpush2.bf16.msra.mxu0 0
    %183 = vmatprep.subr.bf16.mxu0 0
    %184 = vmatpush2.bf16.msra.mxu0 0
    %185 = vmatprep.subr.bf16.mxu0 0
    %186 = vmatpush2.bf16.msra.mxu0 0
    %187 = vmatprep.subr.bf16.mxu0 0
    %188 = vmatpush2.bf16.msra.mxu0 0
    %189 = vmatprep.subr.bf16.mxu0 0
    %190 = vmatpush2.bf16.msra.mxu0 0
    %191 = vmatprep.subr.bf16.mxu0 0
    %192 = vmatpush2.bf16.msra.mxu0 0
    %193 = vmatprep.subr.bf16.mxu0 0
    %194 = vmatpush2.bf16.msra.mxu0 0
    %195 = vmatprep.mubr.bf16.mxu0 0
    %196 = vmatmul.mubr.bf16.gmra.mxu0 %v116
    %v197 = vpop.f32.mrf.mxu0
    %v198 = vadd.f32 %v100, %v197
    %v199 = vpop.f32.mrf.mxu0
    %v200 = vpop.f32.mrf.mxu0
    %v201 = vadd.f32 %v100, %v200
    %v202 = vpop.f32.mrf.mxu0
    %203 = vmatprep.mubr.bf16.mxu0 0
    %204 = vmatmul.mubr.bf16.gmra.mxu0 %v119
    %v205 = vpop.f32.mrf.mxu0
    %v206 = vadd.f32 %v100, %v205
    %v207 = vpop.f32.mrf.mxu0
    %v208 = vpop.f32.mrf.mxu0
    %v209 = vadd.f32 %v100, %v208
    %v210 = vpop.f32.mrf.mxu0
    %211 = vmatprep.mubr.bf16.mxu0 0
    %212 = vmatmul.mubr.bf16.gmra.mxu0 %v122
    %v213 = vpop.f32.mrf.mxu0
    %v214 = vadd.f32 %v100, %v213
    %v215 = vpop.f32.mrf.mxu0
    %v216 = vpop.f32.mrf.mxu0
    %v217 = vadd.f32 %v100, %v216
    %v218 = vpop.f32.mrf.mxu0
    %219 = vmatprep.mubr.bf16.mxu0 0
    %220 = vmatmul.mubr.bf16.gmra.mxu0 %v125
    %v221 = vpop.f32.mrf.mxu0
    %v222 = vadd.f32 %v100, %v221
    %v223 = vpop.f32.mrf.mxu0
    %v224 = vpop.f32.mrf.mxu0
    %v225 = vadd.f32 %v100, %v224
    %v226 = vpop.f32.mrf.mxu0
    %227 = vmatprep.mubr.bf16.mxu0 0
    %228 = vmatmul.mubr.bf16.gmra.mxu0 %v128
    %v229 = vpop.f32.mrf.mxu0
    %v230 = vadd.f32 %v100, %v229
    %v231 = vpop.f32.mrf.mxu0
    %v232 = vpop.f32.mrf.mxu0
    %v233 = vadd.f32 %v100, %v232
    %v234 = vpop.f32.mrf.mxu0
    %235 = vmatprep.mubr.bf16.mxu0 0
    %236 = vmatmul.mubr.bf16.gmra.mxu0 %v131
    %v237 = vpop.f32.mrf.mxu0
    %v238 = vadd.f32 %v100, %v237
    %v239 = vpop.f32.mrf.mxu0
    %v240 = vpop.f32.mrf.mxu0
    %v241 = vadd.f32 %v100, %v240
    %v242 = vpop.f32.mrf.mxu0
    %243 = vmatprep.mubr.bf16.mxu0 0
    %244 = vmatmul.mubr.bf16.gmra.mxu0 %v134
    %v245 = vpop.f32.mrf.mxu0
    %v246 = vadd.f32 %v100, %v245
    %v247 = vpop.f32.mrf.mxu0
    %v248 = vpop.f32.mrf.mxu0
    %v249 = vadd.f32 %v100, %v248
    %v250 = vpop.f32.mrf.mxu0
    %251 = vmatprep.mubr.bf16.mxu0 0
    %252 = vmatmul.mubr.bf16.gmra.mxu0 %v137
    %v253 = vpop.f32.mrf.mxu0
    %v254 = vadd.f32 %v100, %v253
    %v255 = vpop.f32.mrf.mxu0
    %v256 = vpop.f32.mrf.mxu0
    %v257 = vadd.f32 %v100, %v256
    %v258 = vpop.f32.mrf.mxu0
    %259 = vmatprep.mubr.bf16.mxu0 0
    %260 = vmatmul.mubr.bf16.gmra.mxu0 %v140
    %v261 = vpop.f32.mrf.mxu0
    %v262 = vadd.f32 %v100, %v261
    %v263 = vpop.f32.mrf.mxu0
    %v264 = vpop.f32.mrf.mxu0
    %v265 = vadd.f32 %v100, %v264
    %v266 = vpop.f32.mrf.mxu0
    %267 = vmatprep.mubr.bf16.mxu0 0
    %268 = vmatmul.mubr.bf16.gmra.mxu0 %v143
    %v269 = vpop.f32.mrf.mxu0
    %v270 = vadd.f32 %v100, %v269
    %v271 = vpop.f32.mrf.mxu0
    %v272 = vpop.f32.mrf.mxu0
    %v273 = vadd.f32 %v100, %v272
    %v274 = vpop.f32.mrf.mxu0
    %275 = vmatprep.mubr.bf16.mxu0 0
    %276 = vmatmul.mubr.bf16.gmra.mxu0 %v146
    %v277 = vpop.f32.mrf.mxu0
    %v278 = vadd.f32 %v100, %v277
    %v279 = vpop.f32.mrf.mxu0
    %v280 = vpop.f32.mrf.mxu0
    %v281 = vadd.f32 %v100, %v280
    %v282 = vpop.f32.mrf.mxu0
    %283 = vmatprep.mubr.bf16.mxu0 0
    %284 = vmatmul.mubr.bf16.gmra.mxu0 %v149
    %v285 = vpop.f32.mrf.mxu0
    %v286 = vadd.f32 %v100, %v285
    %v287 = vpop.f32.mrf.mxu0
    %v288 = vpop.f32.mrf.mxu0
    %v289 = vadd.f32 %v100, %v288
    %v290 = vpop.f32.mrf.mxu0
    %291 = vmatprep.mubr.bf16.mxu0 0
    %292 = vmatmul.mubr.bf16.gmra.mxu0 %v152
    %v293 = vpop.f32.mrf.mxu0
    %v294 = vadd.f32 %v100, %v293
    %v295 = vpop.f32.mrf.mxu0
    %v296 = vpop.f32.mrf.mxu0
    %v297 = vadd.f32 %v100, %v296
    %v298 = vpop.f32.mrf.mxu0
    %299 = vmatprep.mubr.bf16.mxu0 0
    %300 = vmatmul.mubr.bf16.gmra.mxu0 %v155
    %v301 = vpop.f32.mrf.mxu0
    %v302 = vadd.f32 %v100, %v301
    %v303 = vpop.f32.mrf.mxu0
    %v304 = vpop.f32.mrf.mxu0
    %v305 = vadd.f32 %v100, %v304
    %v306 = vpop.f32.mrf.mxu0
    %307 = vmatprep.mubr.bf16.mxu0 0
    %308 = vmatmul.mubr.bf16.gmra.mxu0 %v158
    %v309 = vpop.f32.mrf.mxu0
    %v310 = vadd.f32 %v100, %v309
    %v311 = vpop.f32.mrf.mxu0
    %v312 = vpop.f32.mrf.mxu0
    %v313 = vadd.f32 %v100, %v312
    %v314 = vpop.f32.mrf.mxu0
    %315 = vmatprep.mubr.bf16.mxu0 0
    %316 = vmatmul.mubr.bf16.gmra.mxu0 %v161
    %v317 = vpop.f32.mrf.mxu0
    %v318 = vadd.f32 %v100, %v317
    %v319 = vpop.f32.mrf.mxu0
    %v320 = vpop.f32.mrf.mxu0
    %v321 = vadd.f32 %v100, %v320
    %v322 = vpop.f32.mrf.mxu0
    %323 = vdwg.mxu0
    %v324 = vmax.f32 %v198, 0.0
    %v325 = vmax.f32 %v201, 0.0
    %v326 = vmax.f32 %v206, 0.0
    %v327 = vmax.f32 %v209, 0.0
    %v328 = vmax.f32 %v214, 0.0
    %v329 = vmax.f32 %v217, 0.0
    %v330 = vmax.f32 %v222, 0.0
    %v331 = vmax.f32 %v225, 0.0
    %v332 = vmax.f32 %v230, 0.0
    %v333 = vmax.f32 %v233, 0.0
    %v334 = vmax.f32 %v238, 0.0
    %v335 = vmax.f32 %v241, 0.0
    %v336 = vmax.f32 %v246, 0.0
    %v337 = vmax.f32 %v249, 0.0
    %v338 = vmax.f32 %v254, 0.0
    %v339 = vmax.f32 %v257, 0.0
    %v340 = vmax.f32 %v262, 0.0
    %v341 = vmax.f32 %v265, 0.0
    %v342 = vmax.f32 %v270, 0.0
    %v343 = vmax.f32 %v273, 0.0
    %v344 = vmax.f32 %v278, 0.0
    %v345 = vmax.f32 %v281, 0.0
    %v346 = vmax.f32 %v286, 0.0
    %v347 = vmax.f32 %v289, 0.0
    %v348 = vmax.f32 %v294, 0.0
    %v349 = vmax.f32 %v297, 0.0
    %v350 = vmax.f32 %v302, 0.0
    %v351 = vmax.f32 %v305, 0.0
    %v352 = vmax.f32 %v310, 0.0
    %v353 = vmax.f32 %v313, 0.0
    %v354 = vmax.f32 %v318, 0.0
    %v355 = vmax.f32 %v321, 0.0
    %v356 = vpack.c.bf16 %v325, %v324
    %v357 = vpack.c.bf16 %v327, %v326
    %v358 = vpack.c.bf16 %v329, %v328
    %v359 = vpack.c.bf16 %v331, %v330
    %v360 = vpack.c.bf16 %v333, %v332
    %v361 = vpack.c.bf16 %v335, %v334
    %v362 = vpack.c.bf16 %v337, %v336
    %v363 = vpack.c.bf16 %v339, %v338
    %v364 = vpack.c.bf16 %v341, %v340
    %v365 = vpack.c.bf16 %v343, %v342
    %v366 = vpack.c.bf16 %v345, %v344
    %v367 = vpack.c.bf16 %v347, %v346
    %v368 = vpack.c.bf16 %v349, %v348
    %v369 = vpack.c.bf16 %v351, %v350
    %v370 = vpack.c.bf16 %v353, %v352
    %v371 = vpack.c.bf16 %v355, %v354
    %v372 = vld [vmem:[%s3] sm:$0xf]
    %v373 = vld [vmem:[%s3 + $0x4] sm:$0xf]
    %v374 = vld [vmem:[%s3 + $0x8] sm:$0xf]
    %v375 = vld [vmem:[%s3 + $0xc] sm:$0xf]
    %v376 = vld [vmem:[%s4] sm:$0x1]
    %v378 = vlaneseq
    %v379 = vshrl.u32 %v378, 7
    %v380 = vsub.s32 0, %v379
    %v381 = vrot.slane %v376, %v380
    %v387 = vunpack.c.l.b16 %v372
    %v388 = vunpack.c.l.b16 %v373
    %v389 = vunpack.c.l.b16 %v374
    %v390 = vunpack.c.l.b16 %v375
    %v391 = vpack.c.b16 %v388, %v387
    %v392 = vpack.c.b16 %v390, %v389
    %v396 = vsel %vm114, %v356, 0
    %v399 = vsel %vm114, %v357, 0
    %v402 = vsel %vm114, %v358, 0
    %v405 = vsel %vm114, %v359, 0
    %v408 = vsel %vm114, %v360, 0
    %v411 = vsel %vm114, %v361, 0
    %v414 = vsel %vm114, %v362, 0
    %v417 = vsel %vm114, %v363, 0
    %v420 = vsel %vm114, %v364, 0
    %v423 = vsel %vm114, %v365, 0
    %v426 = vsel %vm114, %v366, 0
    %v429 = vsel %vm114, %v367, 0
    %v432 = vsel %vm114, %v368, 0
    %v435 = vsel %vm114, %v369, 0
    %v438 = vsel %vm114, %v370, 0
    %v441 = vsel %vm114, %v371, 0
    %443 = vmatprep.subr.bf16.mxu0 0
    %444 = vmatpush1.bf16.msra.mxu0 0
    %445 = vmatprep.subr.bf16.mxu0 0
    %446 = vmatpush1.bf16.msra.mxu0 0
    %447 = vmatprep.subr.bf16.mxu0 0
    %448 = vmatpush1.bf16.msra.mxu0 0
    %449 = vmatprep.subr.bf16.mxu0 0
    %450 = vmatpush1.bf16.msra.mxu0 0
    %451 = vmatprep.subr.bf16.mxu0 0
    %452 = vmatpush1.bf16.msra.mxu0 0
    %453 = vmatprep.subr.bf16.mxu0 0
    %454 = vmatpush1.bf16.msra.mxu0 0
    %455 = vmatprep.subr.bf16.mxu0 0
    %456 = vmatpush1.bf16.msra.mxu0 %v392
    %457 = vmatprep.subr.bf16.mxu0 0
    %458 = vmatpush1.bf16.msra.mxu0 %v391
    %459 = vmatprep.subr.bf16.mxu0 0
    %460 = vmatpush2.bf16.msra.mxu0 0
    %461 = vmatprep.subr.bf16.mxu0 0
    %462 = vmatpush2.bf16.msra.mxu0 0
    %463 = vmatprep.subr.bf16.mxu0 0
    %464 = vmatpush2.bf16.msra.mxu0 0
    %465 = vmatprep.subr.bf16.mxu0 0
    %466 = vmatpush2.bf16.msra.mxu0 0
    %467 = vmatprep.subr.bf16.mxu0 0
    %468 = vmatpush2.bf16.msra.mxu0 0
    %469 = vmatprep.subr.bf16.mxu0 0
    %470 = vmatpush2.bf16.msra.mxu0 0
    %471 = vmatprep.subr.bf16.mxu0 0
    %472 = vmatpush2.bf16.msra.mxu0 0
    %473 = vmatprep.subr.bf16.mxu0 0
    %474 = vmatpush2.bf16.msra.mxu0 0
    %475 = vmatprep.mubr.bf16.mxu0 0
    %476 = vmatmul.mubr.bf16.gmra.mxu0 %v396
    %v477 = vpop.f32.mrf.mxu0
    %v478 = vadd.f32 %v381, %v477
    %v479 = vpop.f32.mrf.mxu0
    %v480 = vpop.f32.mrf.mxu0
    %v481 = vadd.f32 %v381, %v480
    %v482 = vpop.f32.mrf.mxu0
    %483 = vmatprep.mubr.bf16.mxu0 0
    %484 = vmatmul.mubr.bf16.gmra.mxu0 %v399
    %v485 = vpop.f32.mrf.mxu0
    %v486 = vadd.f32 %v381, %v485
    %v487 = vpop.f32.mrf.mxu0
    %v488 = vpop.f32.mrf.mxu0
    %v489 = vadd.f32 %v381, %v488
    %v490 = vpop.f32.mrf.mxu0
    %491 = vmatprep.mubr.bf16.mxu0 0
    %492 = vmatmul.mubr.bf16.gmra.mxu0 %v402
    %v493 = vpop.f32.mrf.mxu0
    %v494 = vadd.f32 %v381, %v493
    %v495 = vpop.f32.mrf.mxu0
    %v496 = vpop.f32.mrf.mxu0
    %v497 = vadd.f32 %v381, %v496
    %v498 = vpop.f32.mrf.mxu0
    %499 = vmatprep.mubr.bf16.mxu0 0
    %500 = vmatmul.mubr.bf16.gmra.mxu0 %v405
    %v501 = vpop.f32.mrf.mxu0
    %v502 = vadd.f32 %v381, %v501
    %v503 = vpop.f32.mrf.mxu0
    %v504 = vpop.f32.mrf.mxu0
    %v505 = vadd.f32 %v381, %v504
    %v506 = vpop.f32.mrf.mxu0
    %507 = vmatprep.mubr.bf16.mxu0 0
    %508 = vmatmul.mubr.bf16.gmra.mxu0 %v408
    %v509 = vpop.f32.mrf.mxu0
    %v510 = vadd.f32 %v381, %v509
    %v511 = vpop.f32.mrf.mxu0
    %v512 = vpop.f32.mrf.mxu0
    %v513 = vadd.f32 %v381, %v512
    %v514 = vpop.f32.mrf.mxu0
    %515 = vmatprep.mubr.bf16.mxu0 0
    %516 = vmatmul.mubr.bf16.gmra.mxu0 %v411
    %v517 = vpop.f32.mrf.mxu0
    %v518 = vadd.f32 %v381, %v517
    %v519 = vpop.f32.mrf.mxu0
    %v520 = vpop.f32.mrf.mxu0
    %v521 = vadd.f32 %v381, %v520
    %v522 = vpop.f32.mrf.mxu0
    %523 = vmatprep.mubr.bf16.mxu0 0
    %524 = vmatmul.mubr.bf16.gmra.mxu0 %v414
    %v525 = vpop.f32.mrf.mxu0
    %v526 = vadd.f32 %v381, %v525
    %v527 = vpop.f32.mrf.mxu0
    %v528 = vpop.f32.mrf.mxu0
    %v529 = vadd.f32 %v381, %v528
    %v530 = vpop.f32.mrf.mxu0
    %531 = vmatprep.mubr.bf16.mxu0 0
    %532 = vmatmul.mubr.bf16.gmra.mxu0 %v417
    %v533 = vpop.f32.mrf.mxu0
    %v534 = vadd.f32 %v381, %v533
    %v535 = vpop.f32.mrf.mxu0
    %v536 = vpop.f32.mrf.mxu0
    %v537 = vadd.f32 %v381, %v536
    %v538 = vpop.f32.mrf.mxu0
    %539 = vmatprep.mubr.bf16.mxu0 0
    %540 = vmatmul.mubr.bf16.gmra.mxu0 %v420
    %v541 = vpop.f32.mrf.mxu0
    %v542 = vadd.f32 %v381, %v541
    %v543 = vpop.f32.mrf.mxu0
    %v544 = vpop.f32.mrf.mxu0
    %v545 = vadd.f32 %v381, %v544
    %v546 = vpop.f32.mrf.mxu0
    %547 = vmatprep.mubr.bf16.mxu0 0
    %548 = vmatmul.mubr.bf16.gmra.mxu0 %v423
    %v549 = vpop.f32.mrf.mxu0
    %v550 = vadd.f32 %v381, %v549
    %v551 = vpop.f32.mrf.mxu0
    %v552 = vpop.f32.mrf.mxu0
    %v553 = vadd.f32 %v381, %v552
    %v554 = vpop.f32.mrf.mxu0
    %555 = vmatprep.mubr.bf16.mxu0 0
    %556 = vmatmul.mubr.bf16.gmra.mxu0 %v426
    %v557 = vpop.f32.mrf.mxu0
    %v558 = vadd.f32 %v381, %v557
    %v559 = vpop.f32.mrf.mxu0
    %v560 = vpop.f32.mrf.mxu0
    %v561 = vadd.f32 %v381, %v560
    %v562 = vpop.f32.mrf.mxu0
    %563 = vmatprep.mubr.bf16.mxu0 0
    %564 = vmatmul.mubr.bf16.gmra.mxu0 %v429
    %v565 = vpop.f32.mrf.mxu0
    %v566 = vadd.f32 %v381, %v565
    %v567 = vpop.f32.mrf.mxu0
    %v568 = vpop.f32.mrf.mxu0
    %v569 = vadd.f32 %v381, %v568
    %v570 = vpop.f32.mrf.mxu0
    %571 = vmatprep.mubr.bf16.mxu0 0
    %572 = vmatmul.mubr.bf16.gmra.mxu0 %v432
    %v573 = vpop.f32.mrf.mxu0
    %v574 = vadd.f32 %v381, %v573
    %v575 = vpop.f32.mrf.mxu0
    %v576 = vpop.f32.mrf.mxu0
    %v577 = vadd.f32 %v381, %v576
    %v578 = vpop.f32.mrf.mxu0
    %579 = vmatprep.mubr.bf16.mxu0 0
    %580 = vmatmul.mubr.bf16.gmra.mxu0 %v435
    %v581 = vpop.f32.mrf.mxu0
    %v582 = vadd.f32 %v381, %v581
    %v583 = vpop.f32.mrf.mxu0
    %v584 = vpop.f32.mrf.mxu0
    %v585 = vadd.f32 %v381, %v584
    %v586 = vpop.f32.mrf.mxu0
    %587 = vmatprep.mubr.bf16.mxu0 0
    %588 = vmatmul.mubr.bf16.gmra.mxu0 %v438
    %v589 = vpop.f32.mrf.mxu0
    %v590 = vadd.f32 %v381, %v589
    %v591 = vpop.f32.mrf.mxu0
    %v592 = vpop.f32.mrf.mxu0
    %v593 = vadd.f32 %v381, %v592
    %v594 = vpop.f32.mrf.mxu0
    %595 = vmatprep.mubr.bf16.mxu0 0
    %596 = vmatmul.mubr.bf16.gmra.mxu0 %v441
    %v597 = vpop.f32.mrf.mxu0
    %v598 = vadd.f32 %v381, %v597
    %v599 = vpop.f32.mrf.mxu0
    %v600 = vpop.f32.mrf.mxu0
    %v601 = vadd.f32 %v381, %v600
    %v602 = vpop.f32.mrf.mxu0
    %603 = vdwg.mxu0
    %v604 = vmax.f32 %v478, 0.0
    %v605 = vmax.f32 %v481, 0.0
    %v606 = vmax.f32 %v486, 0.0
    %v607 = vmax.f32 %v489, 0.0
    %v608 = vmax.f32 %v494, 0.0
    %v609 = vmax.f32 %v497, 0.0
    %v610 = vmax.f32 %v502, 0.0
    %v611 = vmax.f32 %v505, 0.0
    %v612 = vmax.f32 %v510, 0.0
    %v613 = vmax.f32 %v513, 0.0
    %v614 = vmax.f32 %v518, 0.0
    %v615 = vmax.f32 %v521, 0.0
    %v616 = vmax.f32 %v526, 0.0
    %v617 = vmax.f32 %v529, 0.0
    %v618 = vmax.f32 %v534, 0.0
    %v619 = vmax.f32 %v537, 0.0
    %v620 = vmax.f32 %v542, 0.0
    %v621 = vmax.f32 %v545, 0.0
    %v622 = vmax.f32 %v550, 0.0
    %v623 = vmax.f32 %v553, 0.0
    %v624 = vmax.f32 %v558, 0.0
    %v625 = vmax.f32 %v561, 0.0
    %v626 = vmax.f32 %v566, 0.0
    %v627 = vmax.f32 %v569, 0.0
    %v628 = vmax.f32 %v574, 0.0
    %v629 = vmax.f32 %v577, 0.0
    %v630 = vmax.f32 %v582, 0.0
    %v631 = vmax.f32 %v585, 0.0
    %v632 = vmax.f32 %v590, 0.0
    %v633 = vmax.f32 %v593, 0.0
    %v634 = vmax.f32 %v598, 0.0
    %v635 = vmax.f32 %v601, 0.0
    %v636 = vld [vmem:[%s5] sm:$0x1]
    %v637 = vpack.c.bf16 %v605, %v604
    %v638 = vpack.c.bf16 %v607, %v606
    %v639 = vpack.c.bf16 %v609, %v608
    %v640 = vpack.c.bf16 %v611, %v610
    %v641 = vpack.c.bf16 %v613, %v612
    %v642 = vpack.c.bf16 %v615, %v614
    %v643 = vpack.c.bf16 %v617, %v616
    %v644 = vpack.c.bf16 %v619, %v618
    %v645 = vpack.c.bf16 %v621, %v620
    %v646 = vpack.c.bf16 %v623, %v622
    %v647 = vpack.c.bf16 %v625, %v624
    %v648 = vpack.c.bf16 %v627, %v626
    %v649 = vpack.c.bf16 %v629, %v628
    %v650 = vpack.c.bf16 %v631, %v630
    %v651 = vpack.c.bf16 %v633, %v632
    %v652 = vpack.c.bf16 %v635, %v634
    %s653 = sld [smem:[#allocation2]]
    %v654 = vstv %s653
    %vm655 = vcmask 130048
    %v657 = vsel %vm655, %v636, 0
    %v660 = vsel %vm655, %v637, 0
    %v663 = vsel %vm655, %v638, 0
    %v666 = vsel %vm655, %v639, 0
    %v669 = vsel %vm655, %v640, 0
    %v672 = vsel %vm655, %v641, 0
    %v675 = vsel %vm655, %v642, 0
    %v678 = vsel %vm655, %v643, 0
    %v681 = vsel %vm655, %v644, 0
    %v684 = vsel %vm655, %v645, 0
    %v687 = vsel %vm655, %v646, 0
    %v690 = vsel %vm655, %v647, 0
    %v693 = vsel %vm655, %v648, 0
    %v696 = vsel %vm655, %v649, 0
    %v699 = vsel %vm655, %v650, 0
    %v702 = vsel %vm655, %v651, 0
    %v705 = vsel %vm655, %v652, 0
    %707 = vmatprep.subr.bf16.mxu0 0
    %708 = vmatpush1.bf16.xpose.msra.mxu0 %v681
    %709 = vmatprep.subr.bf16.mxu0 0
    %710 = vmatpush1.bf16.xpose.msra.mxu0 %v678
    %711 = vmatprep.subr.bf16.mxu0 0
    %712 = vmatpush1.bf16.xpose.msra.mxu0 %v675
    %713 = vmatprep.subr.bf16.mxu0 0
    %714 = vmatpush1.bf16.xpose.msra.mxu0 %v672
    %715 = vmatprep.subr.bf16.mxu0 0
    %716 = vmatpush1.bf16.xpose.msra.mxu0 %v669
    %717 = vmatprep.subr.bf16.mxu0 0
    %718 = vmatpush1.bf16.xpose.msra.mxu0 %v666
    %719 = vmatprep.subr.bf16.mxu0 0
    %720 = vmatpush1.bf16.xpose.msra.mxu0 %v663
    %721 = vmatprep.subr.bf16.mxu0 0
    %722 = vmatpush1.bf16.xpose.msra.mxu0 %v660
    %723 = vmatprep.subr.bf16.mxu0 0
    %724 = vmatpush2.bf16.xpose.msra.mxu0 %v705
    %725 = vmatprep.subr.bf16.mxu0 0
    %726 = vmatpush2.bf16.xpose.msra.mxu0 %v702
    %727 = vmatprep.subr.bf16.mxu0 0
    %728 = vmatpush2.bf16.xpose.msra.mxu0 %v699
    %729 = vmatprep.subr.bf16.mxu0 0
    %730 = vmatpush2.bf16.xpose.msra.mxu0 %v696
    %731 = vmatprep.subr.bf16.mxu0 0
    %732 = vmatpush2.bf16.xpose.msra.mxu0 %v693
    %733 = vmatprep.subr.bf16.mxu0 0
    %734 = vmatpush2.bf16.xpose.msra.mxu0 %v690
    %735 = vmatprep.subr.bf16.mxu0 0
    %736 = vmatpush2.bf16.xpose.msra.mxu0 %v687
    %737 = vmatprep.subr.bf16.mxu0 0
    %738 = vmatpush2.bf16.xpose.msra.mxu0 %v684
    %739 = vmatprep.mubr.bf16.mxu0 0
    %740 = vmatmul.mubr.bf16.gmra.mxu0 %v657
    %v741 = vpop.f32.mrf.mxu0
    %v742 = vadd.f32 %v654, %v741
    %v743 = vpop.f32.mrf.mxu0
    %v744 = vadd.f32 %v654, %v743
    %v745 = vpop.f32.mrf.mxu0
    %v746 = vpop.f32.mrf.mxu0
    %747 = vdwg.mxu0
    %v750 = vcombine.low %v742, %v744
    %v752 = vunpack.c.l.s4 1966171168
    %v753 = vunpack.c.0.s8 %v752
    %v754 = vlaneseq
    %v755 = vshrl.u32 %v754, 7
    %v756 = vsub.s32 %v753, %v755
    %v757 = vrot.slane %v750, %v756
    %v759 = vunpack.c.l.s4 1966171168
    %v760 = vunpack.c.0.s8 %v759
    %v761 = vlaneseq
    %v762 = vshrl.u32 %v761, 7
    %v763 = vsub.s32 %v760, %v762
    %v764 = vrot.slane %v757, %v763
    %v766 = vlaneseq
    %vm767 = vcmp.ge.s32.totalorder %v766, 0
    %vm768 = vcmp.lt.s32.totalorder %v766, 256
    %vm769 = vmand %vm767, %vm768
    %770 = vst.msk [vmem:[#allocation6] sm:$0x3] %vm769, %v764
    // Predicated region
    $region34: #{tpu_custom_call.1} parent=1 // pred_check
      _
    $region35: #{tpu_custom_call.1} parent=1 // pred_check_branch
      %772 = sbr.rel (0) target = $region37
    $region36: #{tpu_custom_call.1} parent=1 // pred_region
      %s774 = ssub.s32 32, 32
      %775 = vsyncadd [#allocation5], %s774
      %s777 = sshll.u32 [#allocation6], 4
      %s778 = int_to_ptr.vmem [resolvable:$true] %s777
      %780 = dma.vmem_to_hbm [thread:$0]  %s778, 32, %s7, [#allocation5]
    $region37: #{tpu_custom_call.1} parent=1 // pred_fallthru
      _
    // Predicated region
    $region38: #{tpu_custom_call.1} parent=1 // pred_check
      _
    $region39: #{tpu_custom_call.1} parent=1 // pred_check_branch
      %782 = sbr.rel (0) target = $region41
    $region40: #{tpu_custom_call.1} parent=1 // pred_region
      %783 = dma.done [#allocation5], 32
    $region41: #{tpu_custom_call.1} parent=1 // pred_fallthru
      _
    %784 = vsyncpa [#allocation4], 1
    %785 = vsyncpa [#allocation5], 1

</llo_original>
